<compile_context>
chip_gen: v7x
topology: tpu7x:2x2x1
jax: 0.10.0
libtpu: 0.0.40
codegen_flags: <defaults>
</compile_context>

<pallas_src>
import jax
import jax.numpy as jnp
from jax.experimental import pallas as pl
from jax.experimental.pallas import tpu as pltpu


def _round_up(x, m):
    return ((x + m - 1) // m) * m


def _mlp_kernel(x_ref, w1_ref, b1_ref, w2_ref, b2_ref, w3_ref, b3_ref, o_ref):
    # x_ref: (TILE_B, D_in) f32         w1_ref: (D_in, 2H) bf16   b1_ref: (1, 2H) f32
    # w2_ref: (2H, H) bf16              b2_ref: (1, H) f32
    # w3_ref: (1, H) f32 (row vector)   b3_ref: (1, 1) f32 in SMEM
    # o_ref:  (TILE_B, 1) f32
    x = x_ref[...].astype(jnp.bfloat16)

    # Layer 1: bf16 MXU matmul, f32 accumulate, f32 bias + ReLU.
    h1 = jnp.dot(x, w1_ref[...], preferred_element_type=jnp.float32) + b1_ref[...]
    h1 = jnp.maximum(h1, 0.0)

    # Layer 2: bf16 MXU matmul, f32 accumulate, f32 bias + ReLU.
    h2 = jnp.dot(h1.astype(jnp.bfloat16), w2_ref[...],
                 preferred_element_type=jnp.float32) + b2_ref[...]
    h2 = jnp.maximum(h2, 0.0)

    # Layer 3 (out_features == 1): VPU multiply + XLU lane reduction instead
    # of a wasteful N=1 MXU matmul.  Scalar bias read from SMEM.
    y = jnp.sum(h2 * w3_ref[...], axis=-1, keepdims=True) + b3_ref[0, 0]
    o_ref[...] = y.astype(o_ref.dtype)


def rul_mlp_forward(x, params):
    """x: (batch, seq_len, fea_num) float32.  Returns (batch, 1) float32."""
    w1, b1, w2, b2, w3, b3 = params
    batch = x.shape[0]
    xx = x.reshape(batch, -1)                      # same as torch .view(batch, -1)
    d_in = xx.shape[1]
    h1_dim = w1.shape[1]
    h2_dim = w2.shape[1]

    # Batch tile: multiple of 256 (MXU M / sublane aligned), capped at 1024 so a
    # double-buffered tile + live intermediates stay far below v7x's VMEM budget.
    tile_b = min(1024, _round_up(batch, 256))
    grid = (pl.cdiv(batch, tile_b),)

    # One-time layout / precision plumbing (outside the kernel).
    w1_bf = w1.astype(jnp.bfloat16)
    w2_bf = w2.astype(jnp.bfloat16)
    w3_row = w3.reshape(1, h2_dim)                 # (1, H) f32, used on the VPU
    b3_s = b3.reshape(1, 1)                        # scalar -> SMEM

    return pl.pallas_call(
        _mlp_kernel,
        out_shape=jax.ShapeDtypeStruct((batch, 1), jnp.float32),
        grid=grid,
        in_specs=[
            # x: batch-tiled, auto double-buffered.
            # (If DMA ever shows exposed at small tiles, add
            #  pipeline_mode=pl.Buffered(3) here.)
            pl.BlockSpec((tile_b, d_in), lambda i: (i, 0)),
            # Weights / biases: full-array blocks, resident across the grid.
            pl.BlockSpec((d_in, h1_dim), lambda i: (0, 0)),
            pl.BlockSpec((1, h1_dim), lambda i: (0, 0)),
            pl.BlockSpec((h1_dim, h2_dim), lambda i: (0, 0)),
            pl.BlockSpec((1, h2_dim), lambda i: (0, 0)),
            pl.BlockSpec((1, h2_dim), lambda i: (0, 0)),
            # b3: single scalar, keep it in SMEM.
            pl.BlockSpec(memory_space=pltpu.MemorySpace.SMEM),
        ],
        out_specs=pl.BlockSpec((tile_b, 1), lambda i: (i, 0)),
        compiler_params=pltpu.CompilerParams(
            dimension_semantics=("parallel",)),
    )(xx, w1_bf, b1, w2_bf, b2, w3_row, b3_s)


def init_params(key, fea_num, seq_len, hid_size=128):
    """Deterministic init mimicking torch.nn.Linear (U(-1/sqrt(fan_in), +))."""
    inp_dim = fea_num * seq_len

    def linear(key, fan_in, fan_out):
        kw, kb = jax.random.split(key)
        bound = 1.0 / (fan_in ** 0.5)
        w = jax.random.uniform(kw, (fan_in, fan_out), jnp.float32, -bound, bound)
        b = jax.random.uniform(kb, (1, fan_out), jnp.float32, -bound, bound)
        return w, b

    k1, k2, k3 = jax.random.split(key, 3)
    w1, b1 = linear(k1, inp_dim, hid_size * 2)
    w2, b2 = linear(k2, hid_size * 2, hid_size)
    w3, b3 = linear(k3, hid_size, 1)
    return (w1, b1, w2, b2, w3, b3)


def _reference(x, params):
    """Pure f32 JAX reference matching the PyTorch module semantics."""
    w1, b1, w2, b2, w3, b3 = params
    xx = x.reshape(x.shape[0], -1)
    h1 = jnp.maximum(xx @ w1 + b1, 0.0)
    h2 = jnp.maximum(h1 @ w2 + b2, 0.0)
    return h2 @ w3 + b3


if __name__ == "__main__":
    # Small shapes consistent with the module: fea_num=4, seq_len=8, hid_size=32.
    batch, seq_len, fea_num, hid_size = 2, 8, 4, 32

    key = jax.random.PRNGKey(0)
    k_x, k_p = jax.random.split(key)
    x = jax.random.normal(k_x, (batch, seq_len, fea_num), jnp.float32)
    params = init_params(k_p, fea_num, seq_len, hid_size)

    y = rul_mlp_forward(x, params)
    jax.block_until_ready(y)

    y_ref = _reference(x, params)
    assert y.shape == (batch, 1)
    # Tolerance loosened vs the pure-f32 reference because layers 1-2 feed the
    # MXU bf16 inputs (f32 accumulation) — acceptable for an RUL regressor.
    assert jnp.allclose(y, y_ref, atol=3e-2, rtol=3e-2), (y, y_ref)

    print("KERNEL_OK")
</pallas_src>

<mosaic_0001>
module attributes {stable_mosaic.version = 11 : i64} {
  func.func @_mlp_kernel(%arg0: i32, %arg1: memref<256x32xf32, #tpu.memory_space<vmem>>, %arg2: memref<32x64xbf16, #tpu.memory_space<vmem>>, %arg3: memref<1x64xf32, #tpu.memory_space<vmem>>, %arg4: memref<64x32xbf16, #tpu.memory_space<vmem>>, %arg5: memref<1x32xf32, #tpu.memory_space<vmem>>, %arg6: memref<1x32xf32, #tpu.memory_space<vmem>>, %arg7: memref<1x1xf32, #tpu.memory_space<smem>>, %arg8: memref<256x1xf32, #tpu.memory_space<vmem>>) attributes {dimension_semantics = [#tpu.dimension_semantics<parallel>], iteration_bounds = array<i64: 1>, scalar_prefetch = 0 : i64, scratch_operands = 0 : i64, tpu.core_type = #tpu.core_type<tc>, window_params = [{transform_indices = @transform_0, window_bounds = array<i64: 256, 32>}, {pipeline_mode = #tpu.pipeline_mode<synchronous>, transform_indices = @transform_1, window_bounds = array<i64: 32, 64>}, {pipeline_mode = #tpu.pipeline_mode<synchronous>, transform_indices = @transform_2, window_bounds = array<i64: 1, 64>}, {pipeline_mode = #tpu.pipeline_mode<synchronous>, transform_indices = @transform_3, window_bounds = array<i64: 64, 32>}, {pipeline_mode = #tpu.pipeline_mode<synchronous>, transform_indices = @transform_4, window_bounds = array<i64: 1, 32>}, {pipeline_mode = #tpu.pipeline_mode<synchronous>, transform_indices = @transform_5, window_bounds = array<i64: 1, 32>}, {transform_indices = @transform_6, window_bounds = array<i64: 1, 1>}, {transform_indices = @transform_7, window_bounds = array<i64: 256, 1>}]} {
    %c0 = arith.constant 0 : index
    %c0_0 = arith.constant 0 : index
    %0 = vector.load %arg1[%c0, %c0_0] : memref<256x32xf32, #tpu.memory_space<vmem>>, vector<256x32xf32>
    %1 = arith.truncf %0 : vector<256x32xf32> to vector<256x32xbf16>
    %c0_1 = arith.constant 0 : index
    %c0_2 = arith.constant 0 : index
    %2 = vector.load %arg2[%c0_1, %c0_2] : memref<32x64xbf16, #tpu.memory_space<vmem>>, vector<32x64xbf16>
    %cst = arith.constant dense<0.000000e+00> : vector<256x64xf32>
    %3 = tpu.matmul %1, %2, %cst {dimension_numbers = #tpu.dot_dimension_numbers<[1], [0], [0], [1], [0, 0, 1, 1], [], []>} : vector<256x32xbf16>, vector<32x64xbf16>, vector<256x64xf32> -> vector<256x64xf32>
    %c0_3 = arith.constant 0 : index
    %c0_4 = arith.constant 0 : index
    %4 = vector.load %arg3[%c0_3, %c0_4] : memref<1x64xf32, #tpu.memory_space<vmem>>, vector<1x64xf32>
    %5 = vector.broadcast %4 : vector<1x64xf32> to vector<256x64xf32>
    %6 = arith.addf %3, %5 : vector<256x64xf32>
    %cst_5 = arith.constant 0.000000e+00 : f32
    %7 = vector.broadcast %cst_5 : f32 to vector<256x64xf32>
    %8 = arith.maximumf %6, %7 : vector<256x64xf32>
    %9 = arith.truncf %8 : vector<256x64xf32> to vector<256x64xbf16>
    %c0_6 = arith.constant 0 : index
    %c0_7 = arith.constant 0 : index
    %10 = vector.load %arg4[%c0_6, %c0_7] : memref<64x32xbf16, #tpu.memory_space<vmem>>, vector<64x32xbf16>
    %cst_8 = arith.constant dense<0.000000e+00> : vector<256x32xf32>
    %11 = tpu.matmul %9, %10, %cst_8 {dimension_numbers = #tpu.dot_dimension_numbers<[1], [0], [0], [1], [0, 0, 1, 1], [], []>} : vector<256x64xbf16>, vector<64x32xbf16>, vector<256x32xf32> -> vector<256x32xf32>
    %c0_9 = arith.constant 0 : index
    %c0_10 = arith.constant 0 : index
    %12 = vector.load %arg5[%c0_9, %c0_10] : memref<1x32xf32, #tpu.memory_space<vmem>>, vector<1x32xf32>
    %13 = vector.broadcast %12 : vector<1x32xf32> to vector<256x32xf32>
    %14 = arith.addf %11, %13 : vector<256x32xf32>
    %cst_11 = arith.constant 0.000000e+00 : f32
    %15 = vector.broadcast %cst_11 : f32 to vector<256x32xf32>
    %16 = arith.maximumf %14, %15 : vector<256x32xf32>
    %c0_12 = arith.constant 0 : index
    %c0_13 = arith.constant 0 : index
    %17 = vector.load %arg6[%c0_12, %c0_13] : memref<1x32xf32, #tpu.memory_space<vmem>>, vector<1x32xf32>
    %18 = vector.broadcast %17 : vector<1x32xf32> to vector<256x32xf32>
    %19 = arith.mulf %16, %18 : vector<256x32xf32>
    %cst_14 = arith.constant dense<0.000000e+00> : vector<256xf32>
    %20 = vector.multi_reduction <add>, %19, %cst_14 [1] : vector<256x32xf32> to vector<256xf32>
    %21 = vector.shape_cast %20 : vector<256xf32> to vector<256x1xf32>
    %c0_15 = arith.constant 0 : index
    %c0_16 = arith.constant 0 : index
    %22 = memref.load %arg7[%c0_15, %c0_16] : memref<1x1xf32, #tpu.memory_space<smem>>
    %23 = vector.broadcast %22 : f32 to vector<256x1xf32>
    %24 = arith.addf %21, %23 : vector<256x1xf32>
    %c0_17 = arith.constant 0 : index
    %c0_18 = arith.constant 0 : index
    %25 = vector.load %arg8[%c0_17, %c0_18] : memref<256x1xf32, #tpu.memory_space<vmem>>, vector<256x1xf32>
    tpu.vector_store %arg8[%c0_17, %c0_18], %24 {strides = array<i32>} : memref<256x1xf32, #tpu.memory_space<vmem>>, vector<256x1xf32>,
    return
  }
  func.func @transform_0(%arg0: i32) -> (i32, i32) {
    %c0_i32 = arith.constant 0 : i32
    %c0_i32_0 = arith.constant 0 : i32
    return %arg0, %c0_i32 : i32, i32
  }
  func.func @transform_1(%arg0: i32) -> (i32, i32) {
    %c0_i32 = arith.constant 0 : i32
    %c0_i32_0 = arith.constant 0 : i32
    %c0_i32_1 = arith.constant 0 : i32
    return %c0_i32, %c0_i32_0 : i32, i32
  }
  func.func @transform_2(%arg0: i32) -> (i32, i32) {
    %c0_i32 = arith.constant 0 : i32
    %c0_i32_0 = arith.constant 0 : i32
    %c0_i32_1 = arith.constant 0 : i32
    return %c0_i32, %c0_i32_0 : i32, i32
  }
  func.func @transform_3(%arg0: i32) -> (i32, i32) {
    %c0_i32 = arith.constant 0 : i32
    %c0_i32_0 = arith.constant 0 : i32
    %c0_i32_1 = arith.constant 0 : i32
    return %c0_i32, %c0_i32_0 : i32, i32
  }
  func.func @transform_4(%arg0: i32) -> (i32, i32) {
    %c0_i32 = arith.constant 0 : i32
    %c0_i32_0 = arith.constant 0 : i32
    %c0_i32_1 = arith.constant 0 : i32
    return %c0_i32, %c0_i32_0 : i32, i32
  }
  func.func @transform_5(%arg0: i32) -> (i32, i32) {
    %c0_i32 = arith.constant 0 : i32
    %c0_i32_0 = arith.constant 0 : i32
    %c0_i32_1 = arith.constant 0 : i32
    return %c0_i32, %c0_i32_0 : i32, i32
  }
  func.func @transform_6(%arg0: i32) -> (i32, i32) {
    %c0_i32 = arith.constant 0 : i32
    %c0_i32_0 = arith.constant 0 : i32
    %c0_i32_1 = arith.constant 0 : i32
    return %c0_i32, %c0_i32_0 : i32, i32
  }
  func.func @transform_7(%arg0: i32) -> (i32, i32) {
    %c0_i32 = arith.constant 0 : i32
    %c0_i32_0 = arith.constant 0 : i32
    return %arg0, %c0_i32 : i32, i32
  }
}

</mosaic_0001>

<llo_original>
// kernel: tpu_custom_call.1
$region0: #{tpu_custom_call.1}
  #allocation0 [shape = 'u32[]', space=smem, size = 0x4, offset = 0x4, fixed_abs, tag = 'smem constant byte address 0x4 - core index']
  #allocation1 [shape = 'u32[144,128]{1,0:T(1,128)}', space=vmem, size = 0x12000, scoped, tag = 'internal scratch']
  #allocation2 [shape = 'f32[1,1]{1,0:T(1,128)S(6)}', space=smem, size = 0x200, scoped, tag = 'scoped memory for tpu_custom_call.1']
  %s0 = inlined_call_operand.vmem [shape: f32[2,32], index: 0, kind: input, shape index: {}]
  %s1 = inlined_call_operand.vmem [shape: bf16[32,64], index: 1, kind: input, shape index: {}]
  %s2 = inlined_call_operand.vmem [shape: f32[1,64], index: 2, kind: input, shape index: {}]
  %s3 = inlined_call_operand.vmem [shape: bf16[64,32], index: 3, kind: input, shape index: {}]
  %s4 = inlined_call_operand.vmem [shape: f32[1,32], index: 4, kind: input, shape index: {}]
  %s5 = inlined_call_operand.vmem [shape: f32[1,32], index: 5, kind: input, shape index: {}]
  %s6 = inlined_call_operand.<no memory space> [shape: f32[1,1], index: 6, kind: input, shape index: {}]
  %s7 = inlined_call_operand.vmem [shape: f32[2,1], index: 7, kind: output, shape index: {}]
  %s8 = sld [smem:[#allocation0]]
  $region68: #{tpu_custom_call.1} parent=0
    _
  %s10 = ssub.s32 1, %s8
  %s11 = scalar_select 0, %s10, %s8
  %12 = sst [smem:[#allocation2]] %s6
  $region1: #{tpu_custom_call.1} parent=0
    #allocation3 [shape = 'u8[131072]{0}', space=vmem, size = 0x20000, scoped, tag = 'output window, operand 0, single buffered']
    // Predicated region
    $region2: #{tpu_custom_call.1} parent=1 // pred_check
      _
    $region3: #{tpu_custom_call.1} parent=1 // pred_check_branch
      %14 = sbr.rel (0) target = $region5
    $region4: #{tpu_custom_call.1} parent=1 // pred_region
      _
    $region5: #{tpu_custom_call.1} parent=1 // pred_fallthru
      _
    // Predicated region
    $region6: #{tpu_custom_call.1} parent=1 // pred_check
      _
    $region7: #{tpu_custom_call.1} parent=1 // pred_check_branch
      %16 = sbr.rel (0) target = $region9
    $region8: #{tpu_custom_call.1} parent=1 // pred_region
      _
    $region9: #{tpu_custom_call.1} parent=1 // pred_fallthru
      _
    // Predicated region
    $region10: #{tpu_custom_call.1} parent=1 // pred_check
      _
    $region11: #{tpu_custom_call.1} parent=1 // pred_check_branch
      %18 = sbr.rel (0) target = $region13
    $region12: #{tpu_custom_call.1} parent=1 // pred_region
      _
    $region13: #{tpu_custom_call.1} parent=1 // pred_fallthru
      _
    // Predicated region
    $region14: #{tpu_custom_call.1} parent=1 // pred_check
      _
    $region15: #{tpu_custom_call.1} parent=1 // pred_check_branch
      %20 = sbr.rel (0) target = $region17
    $region16: #{tpu_custom_call.1} parent=1 // pred_region
      _
    $region17: #{tpu_custom_call.1} parent=1 // pred_fallthru
      _
    // Predicated region
    $region18: #{tpu_custom_call.1} parent=1 // pred_check
      _
    $region19: #{tpu_custom_call.1} parent=1 // pred_check_branch
      %22 = sbr.rel (0) target = $region21
    $region20: #{tpu_custom_call.1} parent=1 // pred_region
      _
    $region21: #{tpu_custom_call.1} parent=1 // pred_fallthru
      _
    // Predicated region
    $region22: #{tpu_custom_call.1} parent=1 // pred_check
      _
    $region23: #{tpu_custom_call.1} parent=1 // pred_check_branch
      %24 = sbr.rel (0) target = $region25
    $region24: #{tpu_custom_call.1} parent=1 // pred_region
      _
    $region25: #{tpu_custom_call.1} parent=1 // pred_fallthru
      _
    // Predicated region
    $region26: #{tpu_custom_call.1} parent=1 // pred_check
      _
    $region27: #{tpu_custom_call.1} parent=1 // pred_check_branch
      %26 = sbr.rel (0) target = $region29
    $region28: #{tpu_custom_call.1} parent=1 // pred_region
      _
    $region29: #{tpu_custom_call.1} parent=1 // pred_fallthru
      _
    %v28 = vld [vmem:[%s0] sm:$0xff]
    %v29 = vld [vmem:[%s0 + $0x8] sm:$0xff]
    %v30 = vld [vmem:[%s0 + $0x10] sm:$0xff]
    %v31 = vld [vmem:[%s0 + $0x18] sm:$0xff]
    %v32 = vld [vmem:[%s0 + $0x20] sm:$0xff]
    %v33 = vld [vmem:[%s0 + $0x28] sm:$0xff]
    %v34 = vld [vmem:[%s0 + $0x30] sm:$0xff]
    %v35 = vld [vmem:[%s0 + $0x38] sm:$0xff]
    %v36 = vld [vmem:[%s0 + $0x40] sm:$0xff]
    %v37 = vld [vmem:[%s0 + $0x48] sm:$0xff]
    %v38 = vld [vmem:[%s0 + $0x50] sm:$0xff]
    %v39 = vld [vmem:[%s0 + $0x58] sm:$0xff]
    %v40 = vld [vmem:[%s0 + $0x60] sm:$0xff]
    %v41 = vld [vmem:[%s0 + $0x68] sm:$0xff]
    %v42 = vld [vmem:[%s0 + $0x70] sm:$0xff]
    %v43 = vld [vmem:[%s0 + $0x78] sm:$0xff]
    %v44 = vld [vmem:[%s0 + $0x80] sm:$0xff]
    %v45 = vld [vmem:[%s0 + $0x88] sm:$0xff]
    %v46 = vld [vmem:[%s0 + $0x90] sm:$0xff]
    %v47 = vld [vmem:[%s0 + $0x98] sm:$0xff]
    %v48 = vld [vmem:[%s0 + $0xa0] sm:$0xff]
    %v49 = vld [vmem:[%s0 + $0xa8] sm:$0xff]
    %v50 = vld [vmem:[%s0 + $0xb0] sm:$0xff]
    %v51 = vld [vmem:[%s0 + $0xb8] sm:$0xff]
    %v52 = vld [vmem:[%s0 + $0xc0] sm:$0xff]
    %v53 = vld [vmem:[%s0 + $0xc8] sm:$0xff]
    %v54 = vld [vmem:[%s0 + $0xd0] sm:$0xff]
    %v55 = vld [vmem:[%s0 + $0xd8] sm:$0xff]
    %v56 = vld [vmem:[%s0 + $0xe0] sm:$0xff]
    %v57 = vld [vmem:[%s0 + $0xe8] sm:$0xff]
    %v58 = vld [vmem:[%s0 + $0xf0] sm:$0xff]
    %v59 = vld [vmem:[%s0 + $0xf8] sm:$0xff]
    %v60 = vpack.c.bf16 %v29, %v28
    %v61 = vpack.c.bf16 %v31, %v30
    %v62 = vpack.c.bf16 %v33, %v32
    %v63 = vpack.c.bf16 %v35, %v34
    %v64 = vpack.c.bf16 %v37, %v36
    %v65 = vpack.c.bf16 %v39, %v38
    %v66 = vpack.c.bf16 %v41, %v40
    %v67 = vpack.c.bf16 %v43, %v42
    %v68 = vpack.c.bf16 %v45, %v44
    %v69 = vpack.c.bf16 %v47, %v46
    %v70 = vpack.c.bf16 %v49, %v48
    %v71 = vpack.c.bf16 %v51, %v50
    %v72 = vpack.c.bf16 %v53, %v52
    %v73 = vpack.c.bf16 %v55, %v54
    %v74 = vpack.c.bf16 %v57, %v56
    %v75 = vpack.c.bf16 %v59, %v58
    %v76 = vld [vmem:[%s1] sm:$0xf]
    %v77 = vld [vmem:[%s1 + $0x4] sm:$0xf]
    %v78 = vld [vmem:[%s1 + $0x8] sm:$0xf]
    %v79 = vld [vmem:[%s1 + $0xc] sm:$0xf]
    %v80 = vld [vmem:[%s2] sm:$0x1]
    %v82 = vlaneseq
    %v83 = vshrl.u32 %v82, 7
    %v84 = vsub.s32 0, %v83
    %v85 = vrot.slane %v80, %v84
    %v91 = vunpack.c.l.b16 %v76
    %v92 = vunpack.c.l.b16 %v77
    %v93 = vunpack.c.l.b16 %v78
    %v94 = vunpack.c.l.b16 %v79
    %v95 = vpack.c.b16 %v92, %v91
    %v96 = vpack.c.b16 %v94, %v93
    %vm99 = vcmask 261120
    %v101 = vsel %vm99, %v60, 0
    %v104 = vsel %vm99, %v61, 0
    %v107 = vsel %vm99, %v62, 0
    %v110 = vsel %vm99, %v63, 0
    %v113 = vsel %vm99, %v64, 0
    %v116 = vsel %vm99, %v65, 0
    %v119 = vsel %vm99, %v66, 0
    %v122 = vsel %vm99, %v67, 0
    %v125 = vsel %vm99, %v68, 0
    %v128 = vsel %vm99, %v69, 0
    %v131 = vsel %vm99, %v70, 0
    %v134 = vsel %vm99, %v71, 0
    %v137 = vsel %vm99, %v72, 0
    %v140 = vsel %vm99, %v73, 0
    %v143 = vsel %vm99, %v74, 0
    %v146 = vsel %vm99, %v75, 0
    %148 = vmatprep.subr.bf16.mxu0 0
    %149 = vmatpush1.bf16.msra.mxu0 %v95
    %150 = vmatprep.subr.bf16.mxu0 0
    %151 = vmatpush1.bf16.msra.mxu0 %v96
    %152 = vmatprep.subr.bf16.mxu0 0
    %153 = vmatpush1.bf16.msra.mxu0 0
    %154 = vmatprep.subr.bf16.mxu0 0
    %155 = vmatpush1.bf16.msra.mxu0 0
    %156 = vmatprep.subr.bf16.mxu0 0
    %157 = vmatpush1.bf16.msra.mxu0 0
    %158 = vmatprep.subr.bf16.mxu0 0
    %159 = vmatpush1.bf16.msra.mxu0 0
    %160 = vmatprep.subr.bf16.mxu0 0
    %161 = vmatpush1.bf16.msra.mxu0 0
    %162 = vmatprep.subr.bf16.mxu0 0
    %163 = vmatpush1.bf16.msra.mxu0 0
    %164 = vmatprep.subr.bf16.mxu0 0
    %165 = vmatpush1.bf16.msra.mxu0 0
    %166 = vmatprep.subr.bf16.mxu0 0
    %167 = vmatpush1.bf16.msra.mxu0 0
    %168 = vmatprep.subr.bf16.mxu0 0
    %169 = vmatpush1.bf16.msra.mxu0 0
    %170 = vmatprep.subr.bf16.mxu0 0
    %171 = vmatpush1.bf16.msra.mxu0 0
    %172 = vmatprep.subr.bf16.mxu0 0
    %173 = vmatpush1.bf16.msra.mxu0 0
    %174 = vmatprep.subr.bf16.mxu0 0
    %175 = vmatpush1.bf16.msra.mxu0 0
    %176 = vmatprep.subr.bf16.mxu0 0
    %177 = vmatpush1.bf16.msra.mxu0 0
    %178 = vmatprep.subr.bf16.mxu0 0
    %179 = vmatpush1.bf16.msra.mxu0 0
    %180 = vmatprep.mubr.bf16.mxu0 0
    %181 = vmatmul.mubr.bf16.gmra.mrb[0].mxu0 %v101
    %v182 = vpop.f32.mrb[0].mxu0
    %v183 = vadd.f32 %v85, %v182
    %v184 = vpop.f32.mrb[0].mxu0
    %v185 = vpop.f32.mrb[0].mxu0
    %v186 = vadd.f32 %v85, %v185
    %v187 = vpop.f32.mrb[0].mxu0
    %188 = vmatprep.mubr.bf16.mxu0 0
    %189 = vmatmul.mubr.bf16.gmra.mrb[0].mxu0 %v104
    %v190 = vpop.f32.mrb[0].mxu0
    %v191 = vadd.f32 %v85, %v190
    %v192 = vpop.f32.mrb[0].mxu0
    %v193 = vpop.f32.mrb[0].mxu0
    %v194 = vadd.f32 %v85, %v193
    %v195 = vpop.f32.mrb[0].mxu0
    %196 = vmatprep.mubr.bf16.mxu0 0
    %197 = vmatmul.mubr.bf16.gmra.mrb[0].mxu0 %v107
    %v198 = vpop.f32.mrb[0].mxu0
    %v199 = vadd.f32 %v85, %v198
    %v200 = vpop.f32.mrb[0].mxu0
    %v201 = vpop.f32.mrb[0].mxu0
    %v202 = vadd.f32 %v85, %v201
    %v203 = vpop.f32.mrb[0].mxu0
    %204 = vmatprep.mubr.bf16.mxu0 0
    %205 = vmatmul.mubr.bf16.gmra.mrb[0].mxu0 %v110
    %v206 = vpop.f32.mrb[0].mxu0
    %v207 = vadd.f32 %v85, %v206
    %v208 = vpop.f32.mrb[0].mxu0
    %v209 = vpop.f32.mrb[0].mxu0
    %v210 = vadd.f32 %v85, %v209
    %v211 = vpop.f32.mrb[0].mxu0
    %212 = vmatprep.mubr.bf16.mxu0 0
    %213 = vmatmul.mubr.bf16.gmra.mrb[0].mxu0 %v113
    %v214 = vpop.f32.mrb[0].mxu0
    %v215 = vadd.f32 %v85, %v214
    %v216 = vpop.f32.mrb[0].mxu0
    %v217 = vpop.f32.mrb[0].mxu0
    %v218 = vadd.f32 %v85, %v217
    %v219 = vpop.f32.mrb[0].mxu0
    %220 = vmatprep.mubr.bf16.mxu0 0
    %221 = vmatmul.mubr.bf16.gmra.mrb[0].mxu0 %v116
    %v222 = vpop.f32.mrb[0].mxu0
    %v223 = vadd.f32 %v85, %v222
    %v224 = vpop.f32.mrb[0].mxu0
    %v225 = vpop.f32.mrb[0].mxu0
    %v226 = vadd.f32 %v85, %v225
    %v227 = vpop.f32.mrb[0].mxu0
    %228 = vmatprep.mubr.bf16.mxu0 0
    %229 = vmatmul.mubr.bf16.gmra.mrb[0].mxu0 %v119
    %v230 = vpop.f32.mrb[0].mxu0
    %v231 = vadd.f32 %v85, %v230
    %v232 = vpop.f32.mrb[0].mxu0
    %v233 = vpop.f32.mrb[0].mxu0
    %v234 = vadd.f32 %v85, %v233
    %v235 = vpop.f32.mrb[0].mxu0
    %236 = vmatprep.mubr.bf16.mxu0 0
    %237 = vmatmul.mubr.bf16.gmra.mrb[0].mxu0 %v122
    %v238 = vpop.f32.mrb[0].mxu0
    %v239 = vadd.f32 %v85, %v238
    %v240 = vpop.f32.mrb[0].mxu0
    %v241 = vpop.f32.mrb[0].mxu0
    %v242 = vadd.f32 %v85, %v241
    %v243 = vpop.f32.mrb[0].mxu0
    %244 = vmatprep.mubr.bf16.mxu0 0
    %245 = vmatmul.mubr.bf16.gmra.mrb[0].mxu0 %v125
    %v246 = vpop.f32.mrb[0].mxu0
    %v247 = vadd.f32 %v85, %v246
    %v248 = vpop.f32.mrb[0].mxu0
    %v249 = vpop.f32.mrb[0].mxu0
    %v250 = vadd.f32 %v85, %v249
    %v251 = vpop.f32.mrb[0].mxu0
    %252 = vmatprep.mubr.bf16.mxu0 0
    %253 = vmatmul.mubr.bf16.gmra.mrb[0].mxu0 %v128
    %v254 = vpop.f32.mrb[0].mxu0
    %v255 = vadd.f32 %v85, %v254
    %v256 = vpop.f32.mrb[0].mxu0
    %v257 = vpop.f32.mrb[0].mxu0
    %v258 = vadd.f32 %v85, %v257
    %v259 = vpop.f32.mrb[0].mxu0
    %260 = vmatprep.mubr.bf16.mxu0 0
    %261 = vmatmul.mubr.bf16.gmra.mrb[0].mxu0 %v131
    %v262 = vpop.f32.mrb[0].mxu0
    %v263 = vadd.f32 %v85, %v262
    %v264 = vpop.f32.mrb[0].mxu0
    %v265 = vpop.f32.mrb[0].mxu0
    %v266 = vadd.f32 %v85, %v265
    %v267 = vpop.f32.mrb[0].mxu0
    %268 = vmatprep.mubr.bf16.mxu0 0
    %269 = vmatmul.mubr.bf16.gmra.mrb[0].mxu0 %v134
    %v270 = vpop.f32.mrb[0].mxu0
    %v271 = vadd.f32 %v85, %v270
    %v272 = vpop.f32.mrb[0].mxu0
    %v273 = vpop.f32.mrb[0].mxu0
    %v274 = vadd.f32 %v85, %v273
    %v275 = vpop.f32.mrb[0].mxu0
    %276 = vmatprep.mubr.bf16.mxu0 0
    %277 = vmatmul.mubr.bf16.gmra.mrb[0].mxu0 %v137
    %v278 = vpop.f32.mrb[0].mxu0
    %v279 = vadd.f32 %v85, %v278
    %v280 = vpop.f32.mrb[0].mxu0
    %v281 = vpop.f32.mrb[0].mxu0
    %v282 = vadd.f32 %v85, %v281
    %v283 = vpop.f32.mrb[0].mxu0
    %284 = vmatprep.mubr.bf16.mxu0 0
    %285 = vmatmul.mubr.bf16.gmra.mrb[0].mxu0 %v140
    %v286 = vpop.f32.mrb[0].mxu0
    %v287 = vadd.f32 %v85, %v286
    %v288 = vpop.f32.mrb[0].mxu0
    %v289 = vpop.f32.mrb[0].mxu0
    %v290 = vadd.f32 %v85, %v289
    %v291 = vpop.f32.mrb[0].mxu0
    %292 = vmatprep.mubr.bf16.mxu0 0
    %293 = vmatmul.mubr.bf16.gmra.mrb[0].mxu0 %v143
    %v294 = vpop.f32.mrb[0].mxu0
    %v295 = vadd.f32 %v85, %v294
    %v296 = vpop.f32.mrb[0].mxu0
    %v297 = vpop.f32.mrb[0].mxu0
    %v298 = vadd.f32 %v85, %v297
    %v299 = vpop.f32.mrb[0].mxu0
    %300 = vmatprep.mubr.bf16.mxu0 0
    %301 = vmatmul.mubr.bf16.gmra.mrb[0].mxu0 %v146
    %v302 = vpop.f32.mrb[0].mxu0
    %v303 = vadd.f32 %v85, %v302
    %v304 = vpop.f32.mrb[0].mxu0
    %v305 = vpop.f32.mrb[0].mxu0
    %v306 = vadd.f32 %v85, %v305
    %v307 = vpop.f32.mrb[0].mxu0
    %308 = vdwg.mxu0
    %v309 = vmax.f32 %v183, 0.0
    %v310 = vmax.f32 %v186, 0.0
    %v311 = vmax.f32 %v191, 0.0
    %v312 = vmax.f32 %v194, 0.0
    %v313 = vmax.f32 %v199, 0.0
    %v314 = vmax.f32 %v202, 0.0
    %v315 = vmax.f32 %v207, 0.0
    %v316 = vmax.f32 %v210, 0.0
    %v317 = vmax.f32 %v215, 0.0
    %v318 = vmax.f32 %v218, 0.0
    %v319 = vmax.f32 %v223, 0.0
    %v320 = vmax.f32 %v226, 0.0
    %v321 = vmax.f32 %v231, 0.0
    %v322 = vmax.f32 %v234, 0.0
    %v323 = vmax.f32 %v239, 0.0
    %v324 = vmax.f32 %v242, 0.0
    %v325 = vmax.f32 %v247, 0.0
    %v326 = vmax.f32 %v250, 0.0
    %v327 = vmax.f32 %v255, 0.0
    %v328 = vmax.f32 %v258, 0.0
    %v329 = vmax.f32 %v263, 0.0
    %v330 = vmax.f32 %v266, 0.0
    %v331 = vmax.f32 %v271, 0.0
    %v332 = vmax.f32 %v274, 0.0
    %v333 = vmax.f32 %v279, 0.0
    %v334 = vmax.f32 %v282, 0.0
    %v335 = vmax.f32 %v287, 0.0
    %v336 = vmax.f32 %v290, 0.0
    %v337 = vmax.f32 %v295, 0.0
    %v338 = vmax.f32 %v298, 0.0
    %v339 = vmax.f32 %v303, 0.0
    %v340 = vmax.f32 %v306, 0.0
    %v341 = vpack.c.bf16 %v310, %v309
    %v342 = vpack.c.bf16 %v312, %v311
    %v343 = vpack.c.bf16 %v314, %v313
    %v344 = vpack.c.bf16 %v316, %v315
    %v345 = vpack.c.bf16 %v318, %v317
    %v346 = vpack.c.bf16 %v320, %v319
    %v347 = vpack.c.bf16 %v322, %v321
    %v348 = vpack.c.bf16 %v324, %v323
    %v349 = vpack.c.bf16 %v326, %v325
    %v350 = vpack.c.bf16 %v328, %v327
    %v351 = vpack.c.bf16 %v330, %v329
    %v352 = vpack.c.bf16 %v332, %v331
    %v353 = vpack.c.bf16 %v334, %v333
    %v354 = vpack.c.bf16 %v336, %v335
    %v355 = vpack.c.bf16 %v338, %v337
    %v356 = vpack.c.bf16 %v340, %v339
    %v357 = vld [vmem:[%s3] sm:$0xf]
    %v358 = vld [vmem:[%s3 + $0x4] sm:$0xf]
    %v359 = vld [vmem:[%s3 + $0x8] sm:$0xf]
    %v360 = vld [vmem:[%s3 + $0xc] sm:$0xf]
    %v361 = vld [vmem:[%s3 + $0x10] sm:$0xf]
    %v362 = vld [vmem:[%s3 + $0x14] sm:$0xf]
    %v363 = vld [vmem:[%s3 + $0x18] sm:$0xf]
    %v364 = vld [vmem:[%s3 + $0x1c] sm:$0xf]
    %v365 = vld [vmem:[%s4] sm:$0x1]
    %v367 = vlaneseq
    %v368 = vshrl.u32 %v367, 7
    %v369 = vsub.s32 0, %v368
    %v370 = vrot.slane %v365, %v369
    %v380 = vunpack.c.l.b16 %v357
    %v381 = vunpack.c.l.b16 %v358
    %v382 = vunpack.c.l.b16 %v359
    %v383 = vunpack.c.l.b16 %v360
    %v384 = vunpack.c.l.b16 %v361
    %v385 = vunpack.c.l.b16 %v362
    %v386 = vunpack.c.l.b16 %v363
    %v387 = vunpack.c.l.b16 %v364
    %v388 = vpack.c.b16 %v381, %v380
    %v389 = vpack.c.b16 %v383, %v382
    %v390 = vpack.c.b16 %v385, %v384
    %v391 = vpack.c.b16 %v387, %v386
    %vm396 = vcmask 523264
    %v398 = vsel %vm396, %v341, 0
    %v401 = vsel %vm396, %v342, 0
    %v404 = vsel %vm396, %v343, 0
    %v407 = vsel %vm396, %v344, 0
    %v410 = vsel %vm396, %v345, 0
    %v413 = vsel %vm396, %v346, 0
    %v416 = vsel %vm396, %v347, 0
    %v419 = vsel %vm396, %v348, 0
    %v422 = vsel %vm396, %v349, 0
    %v425 = vsel %vm396, %v350, 0
    %v428 = vsel %vm396, %v351, 0
    %v431 = vsel %vm396, %v352, 0
    %v434 = vsel %vm396, %v353, 0
    %v437 = vsel %vm396, %v354, 0
    %v440 = vsel %vm396, %v355, 0
    %v443 = vsel %vm396, %v356, 0
    %445 = vmatprep.subr.bf16.mxu0 0
    %446 = vmatpush1.bf16.msra.mxu0 %v388
    %447 = vmatprep.subr.bf16.mxu0 0
    %448 = vmatpush1.bf16.msra.mxu0 %v389
    %449 = vmatprep.subr.bf16.mxu0 0
    %450 = vmatpush1.bf16.msra.mxu0 %v390
    %451 = vmatprep.subr.bf16.mxu0 0
    %452 = vmatpush1.bf16.msra.mxu0 %v391
    %453 = vmatprep.subr.bf16.mxu0 0
    %454 = vmatpush1.bf16.msra.mxu0 0
    %455 = vmatprep.subr.bf16.mxu0 0
    %456 = vmatpush1.bf16.msra.mxu0 0
    %457 = vmatprep.subr.bf16.mxu0 0
    %458 = vmatpush1.bf16.msra.mxu0 0
    %459 = vmatprep.subr.bf16.mxu0 0
    %460 = vmatpush1.bf16.msra.mxu0 0
    %461 = vmatprep.subr.bf16.mxu0 0
    %462 = vmatpush1.bf16.msra.mxu0 0
    %463 = vmatprep.subr.bf16.mxu0 0
    %464 = vmatpush1.bf16.msra.mxu0 0
    %465 = vmatprep.subr.bf16.mxu0 0
    %466 = vmatpush1.bf16.msra.mxu0 0
    %467 = vmatprep.subr.bf16.mxu0 0
    %468 = vmatpush1.bf16.msra.mxu0 0
    %469 = vmatprep.subr.bf16.mxu0 0
    %470 = vmatpush1.bf16.msra.mxu0 0
    %471 = vmatprep.subr.bf16.mxu0 0
    %472 = vmatpush1.bf16.msra.mxu0 0
    %473 = vmatprep.subr.bf16.mxu0 0
    %474 = vmatpush1.bf16.msra.mxu0 0
    %475 = vmatprep.subr.bf16.mxu0 0
    %476 = vmatpush1.bf16.msra.mxu0 0
    %477 = vmatprep.mubr.bf16.mxu0 0
    %478 = vmatmul.mubr.bf16.gmra.mrb[0].mxu0 %v398
    %v479 = vpop.f32.mrb[0].mxu0
    %v480 = vadd.f32 %v370, %v479
    %v481 = vpop.f32.mrb[0].mxu0
    %v482 = vpop.f32.mrb[0].mxu0
    %v483 = vadd.f32 %v370, %v482
    %v484 = vpop.f32.mrb[0].mxu0
    %485 = vmatprep.mubr.bf16.mxu0 0
    %486 = vmatmul.mubr.bf16.gmra.mrb[0].mxu0 %v401
    %v487 = vpop.f32.mrb[0].mxu0
    %v488 = vadd.f32 %v370, %v487
    %v489 = vpop.f32.mrb[0].mxu0
    %v490 = vpop.f32.mrb[0].mxu0
    %v491 = vadd.f32 %v370, %v490
    %v492 = vpop.f32.mrb[0].mxu0
    %493 = vmatprep.mubr.bf16.mxu0 0
    %494 = vmatmul.mubr.bf16.gmra.mrb[0].mxu0 %v404
    %v495 = vpop.f32.mrb[0].mxu0
    %v496 = vadd.f32 %v370, %v495
    %v497 = vpop.f32.mrb[0].mxu0
    %v498 = vpop.f32.mrb[0].mxu0
    %v499 = vadd.f32 %v370, %v498
    %v500 = vpop.f32.mrb[0].mxu0
    %501 = vmatprep.mubr.bf16.mxu0 0
    %502 = vmatmul.mubr.bf16.gmra.mrb[0].mxu0 %v407
    %v503 = vpop.f32.mrb[0].mxu0
    %v504 = vadd.f32 %v370, %v503
    %v505 = vpop.f32.mrb[0].mxu0
    %v506 = vpop.f32.mrb[0].mxu0
    %v507 = vadd.f32 %v370, %v506
    %v508 = vpop.f32.mrb[0].mxu0
    %509 = vmatprep.mubr.bf16.mxu0 0
    %510 = vmatmul.mubr.bf16.gmra.mrb[0].mxu0 %v410
    %v511 = vpop.f32.mrb[0].mxu0
    %v512 = vadd.f32 %v370, %v511
    %v513 = vpop.f32.mrb[0].mxu0
    %v514 = vpop.f32.mrb[0].mxu0
    %v515 = vadd.f32 %v370, %v514
    %v516 = vpop.f32.mrb[0].mxu0
    %517 = vmatprep.mubr.bf16.mxu0 0
    %518 = vmatmul.mubr.bf16.gmra.mrb[0].mxu0 %v413
    %v519 = vpop.f32.mrb[0].mxu0
    %v520 = vadd.f32 %v370, %v519
    %v521 = vpop.f32.mrb[0].mxu0
    %v522 = vpop.f32.mrb[0].mxu0
    %v523 = vadd.f32 %v370, %v522
    %v524 = vpop.f32.mrb[0].mxu0
    %525 = vmatprep.mubr.bf16.mxu0 0
    %526 = vmatmul.mubr.bf16.gmra.mrb[0].mxu0 %v416
    %v527 = vpop.f32.mrb[0].mxu0
    %v528 = vadd.f32 %v370, %v527
    %v529 = vpop.f32.mrb[0].mxu0
    %v530 = vpop.f32.mrb[0].mxu0
    %v531 = vadd.f32 %v370, %v530
    %v532 = vpop.f32.mrb[0].mxu0
    %533 = vmatprep.mubr.bf16.mxu0 0
    %534 = vmatmul.mubr.bf16.gmra.mrb[0].mxu0 %v419
    %v535 = vpop.f32.mrb[0].mxu0
    %v536 = vadd.f32 %v370, %v535
    %v537 = vpop.f32.mrb[0].mxu0
    %v538 = vpop.f32.mrb[0].mxu0
    %v539 = vadd.f32 %v370, %v538
    %v540 = vpop.f32.mrb[0].mxu0
    %541 = vmatprep.mubr.bf16.mxu0 0
    %542 = vmatmul.mubr.bf16.gmra.mrb[0].mxu0 %v422
    %v543 = vpop.f32.mrb[0].mxu0
    %v544 = vadd.f32 %v370, %v543
    %v545 = vpop.f32.mrb[0].mxu0
    %v546 = vpop.f32.mrb[0].mxu0
    %v547 = vadd.f32 %v370, %v546
    %v548 = vpop.f32.mrb[0].mxu0
    %549 = vmatprep.mubr.bf16.mxu0 0
    %550 = vmatmul.mubr.bf16.gmra.mrb[0].mxu0 %v425
    %v551 = vpop.f32.mrb[0].mxu0
    %v552 = vadd.f32 %v370, %v551
    %v553 = vpop.f32.mrb[0].mxu0
    %v554 = vpop.f32.mrb[0].mxu0
    %v555 = vadd.f32 %v370, %v554
    %v556 = vpop.f32.mrb[0].mxu0
    %557 = vmatprep.mubr.bf16.mxu0 0
    %558 = vmatmul.mubr.bf16.gmra.mrb[0].mxu0 %v428
    %v559 = vpop.f32.mrb[0].mxu0
    %v560 = vadd.f32 %v370, %v559
    %v561 = vpop.f32.mrb[0].mxu0
    %v562 = vpop.f32.mrb[0].mxu0
    %v563 = vadd.f32 %v370, %v562
    %v564 = vpop.f32.mrb[0].mxu0
    %565 = vmatprep.mubr.bf16.mxu0 0
    %566 = vmatmul.mubr.bf16.gmra.mrb[0].mxu0 %v431
    %v567 = vpop.f32.mrb[0].mxu0
    %v568 = vadd.f32 %v370, %v567
    %v569 = vpop.f32.mrb[0].mxu0
    %v570 = vpop.f32.mrb[0].mxu0
    %v571 = vadd.f32 %v370, %v570
    %v572 = vpop.f32.mrb[0].mxu0
    %573 = vmatprep.mubr.bf16.mxu0 0
    %574 = vmatmul.mubr.bf16.gmra.mrb[0].mxu0 %v434
    %v575 = vpop.f32.mrb[0].mxu0
    %v576 = vadd.f32 %v370, %v575
    %v577 = vpop.f32.mrb[0].mxu0
    %v578 = vpop.f32.mrb[0].mxu0
    %v579 = vadd.f32 %v370, %v578
    %v580 = vpop.f32.mrb[0].mxu0
    %581 = vmatprep.mubr.bf16.mxu0 0
    %582 = vmatmul.mubr.bf16.gmra.mrb[0].mxu0 %v437
    %v583 = vpop.f32.mrb[0].mxu0
    %v584 = vadd.f32 %v370, %v583
    %v585 = vpop.f32.mrb[0].mxu0
    %v586 = vpop.f32.mrb[0].mxu0
    %v587 = vadd.f32 %v370, %v586
    %v588 = vpop.f32.mrb[0].mxu0
    %589 = vmatprep.mubr.bf16.mxu0 0
    %590 = vmatmul.mubr.bf16.gmra.mrb[0].mxu0 %v440
    %v591 = vpop.f32.mrb[0].mxu0
    %v592 = vadd.f32 %v370, %v591
    %v593 = vpop.f32.mrb[0].mxu0
    %v594 = vpop.f32.mrb[0].mxu0
    %v595 = vadd.f32 %v370, %v594
    %v596 = vpop.f32.mrb[0].mxu0
    %597 = vmatprep.mubr.bf16.mxu0 0
    %598 = vmatmul.mubr.bf16.gmra.mrb[0].mxu0 %v443
    %v599 = vpop.f32.mrb[0].mxu0
    %v600 = vadd.f32 %v370, %v599
    %v601 = vpop.f32.mrb[0].mxu0
    %v602 = vpop.f32.mrb[0].mxu0
    %v603 = vadd.f32 %v370, %v602
    %v604 = vpop.f32.mrb[0].mxu0
    %605 = vdwg.mxu0
    %v606 = vmax.f32 %v480, 0.0
    %v607 = vmax.f32 %v483, 0.0
    %v608 = vmax.f32 %v488, 0.0
    %v609 = vmax.f32 %v491, 0.0
    %v610 = vmax.f32 %v496, 0.0
    %v611 = vmax.f32 %v499, 0.0
    %v612 = vmax.f32 %v504, 0.0
    %v613 = vmax.f32 %v507, 0.0
    %v614 = vmax.f32 %v512, 0.0
    %v615 = vmax.f32 %v515, 0.0
    %v616 = vmax.f32 %v520, 0.0
    %v617 = vmax.f32 %v523, 0.0
    %v618 = vmax.f32 %v528, 0.0
    %v619 = vmax.f32 %v531, 0.0
    %v620 = vmax.f32 %v536, 0.0
    %v621 = vmax.f32 %v539, 0.0
    %v622 = vmax.f32 %v544, 0.0
    %v623 = vmax.f32 %v547, 0.0
    %v624 = vmax.f32 %v552, 0.0
    %v625 = vmax.f32 %v555, 0.0
    %v626 = vmax.f32 %v560, 0.0
    %v627 = vmax.f32 %v563, 0.0
    %v628 = vmax.f32 %v568, 0.0
    %v629 = vmax.f32 %v571, 0.0
    %v630 = vmax.f32 %v576, 0.0
    %v631 = vmax.f32 %v579, 0.0
    %v632 = vmax.f32 %v584, 0.0
    %v633 = vmax.f32 %v587, 0.0
    %v634 = vmax.f32 %v592, 0.0
    %v635 = vmax.f32 %v595, 0.0
    %v636 = vmax.f32 %v600, 0.0
    %v637 = vmax.f32 %v603, 0.0
    %v638 = vld [vmem:[%s5] sm:$0x1]
    %v640 = vlaneseq
    %v641 = vshrl.u32 %v640, 7
    %v642 = vsub.s32 0, %v641
    %v643 = vrot.slane %v638, %v642
    %v645 = vmul.f32 %v606, %v643
    %v646 = vmul.f32 %v607, %v643
    %v647 = vmul.f32 %v608, %v643
    %v648 = vmul.f32 %v609, %v643
    %v649 = vmul.f32 %v610, %v643
    %v650 = vmul.f32 %v611, %v643
    %v651 = vmul.f32 %v612, %v643
    %v652 = vmul.f32 %v613, %v643
    %v653 = vmul.f32 %v614, %v643
    %v654 = vmul.f32 %v615, %v643
    %v655 = vmul.f32 %v616, %v643
    %v656 = vmul.f32 %v617, %v643
    %v657 = vmul.f32 %v618, %v643
    %v658 = vmul.f32 %v619, %v643
    %v659 = vmul.f32 %v620, %v643
    %v660 = vmul.f32 %v621, %v643
    %v661 = vmul.f32 %v622, %v643
    %v662 = vmul.f32 %v623, %v643
    %v663 = vmul.f32 %v624, %v643
    %v664 = vmul.f32 %v625, %v643
    %v665 = vmul.f32 %v626, %v643
    %v666 = vmul.f32 %v627, %v643
    %v667 = vmul.f32 %v628, %v643
    %v668 = vmul.f32 %v629, %v643
    %v669 = vmul.f32 %v630, %v643
    %v670 = vmul.f32 %v631, %v643
    %v671 = vmul.f32 %v632, %v643
    %v672 = vmul.f32 %v633, %v643
    %v673 = vmul.f32 %v634, %v643
    %v674 = vmul.f32 %v635, %v643
    %v675 = vmul.f32 %v636, %v643
    %v676 = vmul.f32 %v637, %v643
    %v677 = vsel %vm99, %v645, 0.0
    %678 = vadd.xlane.f32.xlu0 %v677
    %v679 = vpop.xlane.xlu0 %678
    %v680 = vsel %vm99, %v646, 0.0
    %681 = vadd.xlane.f32.xlu0 %v680
    %v682 = vpop.xlane.xlu0 %681
    %v683 = vsel %vm99, %v647, 0.0
    %684 = vadd.xlane.f32.xlu0 %v683
    %v685 = vpop.xlane.xlu0 %684
    %v686 = vsel %vm99, %v648, 0.0
    %687 = vadd.xlane.f32.xlu0 %v686
    %v688 = vpop.xlane.xlu0 %687
    %v689 = vsel %vm99, %v649, 0.0
    %690 = vadd.xlane.f32.xlu0 %v689
    %v691 = vpop.xlane.xlu0 %690
    %v692 = vsel %vm99, %v650, 0.0
    %693 = vadd.xlane.f32.xlu0 %v692
    %v694 = vpop.xlane.xlu0 %693
    %v695 = vsel %vm99, %v651, 0.0
    %696 = vadd.xlane.f32.xlu0 %v695
    %v697 = vpop.xlane.xlu0 %696
    %v698 = vsel %vm99, %v652, 0.0
    %699 = vadd.xlane.f32.xlu0 %v698
    %v700 = vpop.xlane.xlu0 %699
    %v701 = vsel %vm99, %v653, 0.0
    %702 = vadd.xlane.f32.xlu0 %v701
    %v703 = vpop.xlane.xlu0 %702
    %v704 = vsel %vm99, %v654, 0.0
    %705 = vadd.xlane.f32.xlu0 %v704
    %v706 = vpop.xlane.xlu0 %705
    %v707 = vsel %vm99, %v655, 0.0
    %708 = vadd.xlane.f32.xlu0 %v707
    %v709 = vpop.xlane.xlu0 %708
    %v710 = vsel %vm99, %v656, 0.0
    %711 = vadd.xlane.f32.xlu0 %v710
    %v712 = vpop.xlane.xlu0 %711
    %v713 = vsel %vm99, %v657, 0.0
    %714 = vadd.xlane.f32.xlu0 %v713
    %v715 = vpop.xlane.xlu0 %714
    %v716 = vsel %vm99, %v658, 0.0
    %717 = vadd.xlane.f32.xlu0 %v716
    %v718 = vpop.xlane.xlu0 %717
    %v719 = vsel %vm99, %v659, 0.0
    %720 = vadd.xlane.f32.xlu0 %v719
    %v721 = vpop.xlane.xlu0 %720
    %v722 = vsel %vm99, %v660, 0.0
    %723 = vadd.xlane.f32.xlu0 %v722
    %v724 = vpop.xlane.xlu0 %723
    %v725 = vsel %vm99, %v661, 0.0
    %726 = vadd.xlane.f32.xlu0 %v725
    %v727 = vpop.xlane.xlu0 %726
    %v728 = vsel %vm99, %v662, 0.0
    %729 = vadd.xlane.f32.xlu0 %v728
    %v730 = vpop.xlane.xlu0 %729
    %v731 = vsel %vm99, %v663, 0.0
    %732 = vadd.xlane.f32.xlu0 %v731
    %v733 = vpop.xlane.xlu0 %732
    %v734 = vsel %vm99, %v664, 0.0
    %735 = vadd.xlane.f32.xlu0 %v734
    %v736 = vpop.xlane.xlu0 %735
    %v737 = vsel %vm99, %v665, 0.0
    %738 = vadd.xlane.f32.xlu0 %v737
    %v739 = vpop.xlane.xlu0 %738
    %v740 = vsel %vm99, %v666, 0.0
    %741 = vadd.xlane.f32.xlu0 %v740
    %v742 = vpop.xlane.xlu0 %741
    %v743 = vsel %vm99, %v667, 0.0
    %744 = vadd.xlane.f32.xlu0 %v743
    %v745 = vpop.xlane.xlu0 %744
    %v746 = vsel %vm99, %v668, 0.0
    %747 = vadd.xlane.f32.xlu0 %v746
    %v748 = vpop.xlane.xlu0 %747
    %v749 = vsel %vm99, %v669, 0.0
    %750 = vadd.xlane.f32.xlu0 %v749
    %v751 = vpop.xlane.xlu0 %750
    %v752 = vsel %vm99, %v670, 0.0
    %753 = vadd.xlane.f32.xlu0 %v752
    %v754 = vpop.xlane.xlu0 %753
    %v755 = vsel %vm99, %v671, 0.0
    %756 = vadd.xlane.f32.xlu0 %v755
    %v757 = vpop.xlane.xlu0 %756
    %v758 = vsel %vm99, %v672, 0.0
    %759 = vadd.xlane.f32.xlu0 %v758
    %v760 = vpop.xlane.xlu0 %759
    %v761 = vsel %vm99, %v673, 0.0
    %762 = vadd.xlane.f32.xlu0 %v761
    %v763 = vpop.xlane.xlu0 %762
    %v764 = vsel %vm99, %v674, 0.0
    %765 = vadd.xlane.f32.xlu0 %v764
    %v766 = vpop.xlane.xlu0 %765
    %v767 = vsel %vm99, %v675, 0.0
    %768 = vadd.xlane.f32.xlu0 %v767
    %v769 = vpop.xlane.xlu0 %768
    %v770 = vsel %vm99, %v676, 0.0
    %771 = vadd.xlane.f32.xlu0 %v770
    %v772 = vpop.xlane.xlu0 %771
    %s773 = sld [smem:[#allocation2]]
    %v774 = vstv %s773
    %v775 = vadd.f32 %v679, %v774
    %v776 = vadd.f32 %v682, %v774
    %v777 = vadd.f32 %v685, %v774
    %v778 = vadd.f32 %v688, %v774
    %v779 = vadd.f32 %v691, %v774
    %v780 = vadd.f32 %v694, %v774
    %v781 = vadd.f32 %v697, %v774
    %v782 = vadd.f32 %v700, %v774
    %v783 = vadd.f32 %v703, %v774
    %v784 = vadd.f32 %v706, %v774
    %v785 = vadd.f32 %v709, %v774
    %v786 = vadd.f32 %v712, %v774
    %v787 = vadd.f32 %v715, %v774
    %v788 = vadd.f32 %v718, %v774
    %v789 = vadd.f32 %v721, %v774
    %v790 = vadd.f32 %v724, %v774
    %v791 = vadd.f32 %v727, %v774
    %v792 = vadd.f32 %v730, %v774
    %v793 = vadd.f32 %v733, %v774
    %v794 = vadd.f32 %v736, %v774
    %v795 = vadd.f32 %v739, %v774
    %v796 = vadd.f32 %v742, %v774
    %v797 = vadd.f32 %v745, %v774
    %v798 = vadd.f32 %v748, %v774
    %v799 = vadd.f32 %v751, %v774
    %v800 = vadd.f32 %v754, %v774
    %v801 = vadd.f32 %v757, %v774
    %v802 = vadd.f32 %v760, %v774
    %v803 = vadd.f32 %v763, %v774
    %v804 = vadd.f32 %v766, %v774
    %v805 = vadd.f32 %v769, %v774
    %v806 = vadd.f32 %v772, %v774
    %vm807 = vcmask 7168
    %808 = vst.msk [vmem:[#allocation3] sm:$0xff] %vm807, %v775
    %809 = vst.msk [vmem:[#allocation3 + $0x8] sm:$0xff] %vm807, %v776
    %810 = vst.msk [vmem:[#allocation3 + $0x10] sm:$0xff] %vm807, %v777
    %811 = vst.msk [vmem:[#allocation3 + $0x18] sm:$0xff] %vm807, %v778
    %812 = vst.msk [vmem:[#allocation3 + $0x20] sm:$0xff] %vm807, %v779
    %813 = vst.msk [vmem:[#allocation3 + $0x28] sm:$0xff] %vm807, %v780
    %814 = vst.msk [vmem:[#allocation3 + $0x30] sm:$0xff] %vm807, %v781
    %815 = vst.msk [vmem:[#allocation3 + $0x38] sm:$0xff] %vm807, %v782
    %816 = vst.msk [vmem:[#allocation3 + $0x40] sm:$0xff] %vm807, %v783
    %817 = vst.msk [vmem:[#allocation3 + $0x48] sm:$0xff] %vm807, %v784
    %818 = vst.msk [vmem:[#allocation3 + $0x50] sm:$0xff] %vm807, %v785
    %819 = vst.msk [vmem:[#allocation3 + $0x58] sm:$0xff] %vm807, %v786
    %820 = vst.msk [vmem:[#allocation3 + $0x60] sm:$0xff] %vm807, %v787
    %821 = vst.msk [vmem:[#allocation3 + $0x68] sm:$0xff] %vm807, %v788
    %822 = vst.msk [vmem:[#allocation3 + $0x70] sm:$0xff] %vm807, %v789
    %823 = vst.msk [vmem:[#allocation3 + $0x78] sm:$0xff] %vm807, %v790
    %824 = vst.msk [vmem:[#allocation3 + $0x80] sm:$0xff] %vm807, %v791
    %825 = vst.msk [vmem:[#allocation3 + $0x88] sm:$0xff] %vm807, %v792
    %826 = vst.msk [vmem:[#allocation3 + $0x90] sm:$0xff] %vm807, %v793
    %827 = vst.msk [vmem:[#allocation3 + $0x98] sm:$0xff] %vm807, %v794
    %828 = vst.msk [vmem:[#allocation3 + $0xa0] sm:$0xff] %vm807, %v795
    %829 = vst.msk [vmem:[#allocation3 + $0xa8] sm:$0xff] %vm807, %v796
    %830 = vst.msk [vmem:[#allocation3 + $0xb0] sm:$0xff] %vm807, %v797
    %831 = vst.msk [vmem:[#allocation3 + $0xb8] sm:$0xff] %vm807, %v798
    %832 = vst.msk [vmem:[#allocation3 + $0xc0] sm:$0xff] %vm807, %v799
    %833 = vst.msk [vmem:[#allocation3 + $0xc8] sm:$0xff] %vm807, %v800
    %834 = vst.msk [vmem:[#allocation3 + $0xd0] sm:$0xff] %vm807, %v801
    %835 = vst.msk [vmem:[#allocation3 + $0xd8] sm:$0xff] %vm807, %v802
    %836 = vst.msk [vmem:[#allocation3 + $0xe0] sm:$0xff] %vm807, %v803
    %837 = vst.msk [vmem:[#allocation3 + $0xe8] sm:$0xff] %vm807, %v804
    %838 = vst.msk [vmem:[#allocation3 + $0xf0] sm:$0xff] %vm807, %v805
    %839 = vst.msk [vmem:[#allocation3 + $0xf8] sm:$0xff] %vm807, %v806
    // Predicated region
    $region30: #{tpu_custom_call.1} parent=1 // pred_check
      _
    $region31: #{tpu_custom_call.1} parent=1 // pred_check_branch
      %841 = sbr.rel (0) target = $region33
    $region32: #{tpu_custom_call.1} parent=1 // pred_region
      // Predicated region
      $region34: #{tpu_custom_call.1} parent=32 // pred_check
        _
      $region35: #{tpu_custom_call.1} parent=32 // pred_check_branch
        %843 = sbr.rel (0) target = $region37
      $region36: #{tpu_custom_call.1} parent=32 // pred_region
        // Predicated region
        $region38: #{tpu_custom_call.1} parent=36 // pred_check
          _
        $region39: #{tpu_custom_call.1} parent=36 // pred_check_branch
          %845 = sbr.rel target = $region41
        $region40: #{tpu_custom_call.1} parent=36 // pred_region
          // Predicated region
          $region53: #{tpu_custom_call.1} parent=40 // pred_check
            _
          $region54: #{tpu_custom_call.1} parent=40 // pred_check_branch
            %860 = sbr.rel (0) target = $region56
          $region55: #{tpu_custom_call.1} parent=40 // pred_region
            loop: start=0, step=1, limit=1
            $region57: #{tpu_custom_call.1} parent=55 // loop_pre_header
              _
            $region58: #{tpu_custom_call.1} parent=55 // loop_header
              %s863 = sphi 0, %s867
              %p864 = scmp.ge.s32.totalorder %s863, 1
              %s868 = sphi [#allocation3], [#allocation3]
              %s869 = sphi %s7, %s7
            $region59: #{tpu_custom_call.1} parent=55 // loop_header_branch
              %866 = sbr.rel (%p864) target = $region63
            $region60: #{tpu_custom_call.1} parent=55 // loop_body
              %v870 = vld [vmem:[%s868] sm:$0x3]
              %871 = vst [vmem:[%s869] sm:$0x3] %v870
            $region61: #{tpu_custom_call.1} parent=55 // loop_footer
              %s867 = sadd.s32 1, %s863
            $region62: #{tpu_custom_call.1} parent=55 // loop_footer_branch
              %862 = sbr.rel target = $region58
            $region63: #{tpu_custom_call.1} parent=55 // loop_exit
              _
          $region56: #{tpu_custom_call.1} parent=40 // pred_fallthru
            _
        $region41: #{tpu_custom_call.1} parent=36 // pred_fallthru
          _
        // Predicated region
        $region42: #{tpu_custom_call.1} parent=36 // pred_check
          _
        $region43: #{tpu_custom_call.1} parent=36 // pred_check_branch
          %847 = sbr.rel (0) target = $region45
        $region44: #{tpu_custom_call.1} parent=36 // pred_region
          loop: start=0, step=1, limit=1
          $region46: #{tpu_custom_call.1} parent=44 // loop_pre_header
            _
          $region47: #{tpu_custom_call.1} parent=44 // loop_header
            %s850 = sphi 0, %s854
            %p851 = scmp.ge.s32.totalorder %s850, 1
            %s855 = sphi [#allocation3], [#allocation3]
            %s856 = sphi %s7, %s7
          $region48: #{tpu_custom_call.1} parent=44 // loop_header_branch
            %853 = sbr.rel (%p851) target = $region52
          $region49: #{tpu_custom_call.1} parent=44 // loop_body
            %v857 = vld [vmem:[%s855] sm:$0x3]
            %858 = vst [vmem:[%s856] sm:$0x3] %v857
          $region50: #{tpu_custom_call.1} parent=44 // loop_footer
            %s854 = sadd.s32 1, %s850
          $region51: #{tpu_custom_call.1} parent=44 // loop_footer_branch
            %849 = sbr.rel target = $region47
          $region52: #{tpu_custom_call.1} parent=44 // loop_exit
            _
        $region45: #{tpu_custom_call.1} parent=36 // pred_fallthru
          _
      $region37: #{tpu_custom_call.1} parent=32 // pred_fallthru
        _
      %872 = vnop
    $region33: #{tpu_custom_call.1} parent=1 // pred_fallthru
      _
    // Predicated region
    $region64: #{tpu_custom_call.1} parent=1 // pred_check
      _
    $region65: #{tpu_custom_call.1} parent=1 // pred_check_branch
      %874 = sbr.rel (0) target = $region67
    $region66: #{tpu_custom_call.1} parent=1 // pred_region
      _
    $region67: #{tpu_custom_call.1} parent=1 // pred_fallthru
      _

</llo_original>
